<compile_context>
chip_gen: v5e
topology: v5e:2x2
jax: 0.10.0
libtpu: 0.0.40
codegen_flags: <defaults>
</compile_context>

<pallas_src>
import jax
import jax.numpy as jnp
from jax.experimental import pallas as pl
from jax.experimental.pallas import tpu as pltpu


def _round_up(n, m):
    return ((n + m - 1) // m) * m


def _choose_tiling(B, *, max_tile=512, min_steps=4):
    """Pick (tm, Bp, n_steps).

    Guarantees: tm is a multiple of 8 and <= max_tile; the grid has at least
    min_steps steps whenever B >= 8*min_steps (2 per TensorCore on v7x); the
    step count is even when > 1; batch padding is at most ~8*n_steps rows
    (never padded up to a whole tile).
    """
    Bp8 = _round_up(max(B, 1), 8)
    n_steps = max(pl.cdiv(Bp8, max_tile),      # respect the max tile size
                  min(min_steps, Bp8 // 8),    # >=2 steps per TC when possible
                  1)
    if n_steps > 1 and n_steps % 2:
        n_steps += 1                           # even step count: megacore balance
    tm = _round_up(pl.cdiv(Bp8, n_steps), 8)
    return tm, n_steps * tm, n_steps


def autoencoder_kernel(x_ref,
                       we1_ref, be1_ref, we2_ref, be2_ref,
                       wd1_ref, bd1_ref, wd2_ref, bd2_ref,
                       out_ref):
    """Fused encoder + decoder forward for one batch tile.

    Weights arrive as bf16; activations are cast to bf16 only at the MXU
    boundary, with f32 accumulation and f32 bias-add / ReLU epilogues
    (safe on v5e which has no bf16 VPU path).
    """
    x = x_ref[...].astype(jnp.bfloat16)

    # ---- Encoder: D -> H -> L (Linear + ReLU) ----
    h = jnp.dot(x, we1_ref[...], preferred_element_type=jnp.float32) + be1_ref[...]
    h = jnp.maximum(h, 0.0)
    z = jnp.dot(h.astype(jnp.bfloat16), we2_ref[...],
                preferred_element_type=jnp.float32) + be2_ref[...]
    z = jnp.maximum(z, 0.0)

    # ---- Decoder: L -> H -> D (Linear + ReLU, final layer linear) ----
    d = jnp.dot(z.astype(jnp.bfloat16), wd1_ref[...],
                preferred_element_type=jnp.float32) + bd1_ref[...]
    d = jnp.maximum(d, 0.0)
    out = jnp.dot(d.astype(jnp.bfloat16), wd2_ref[...],
                  preferred_element_type=jnp.float32) + bd2_ref[...]

    out_ref[...] = out.astype(out_ref.dtype)


def autoencoder_forward(x, params, *, tm=None, max_tile=512,
                        out_dtype=jnp.float32):
    """Batch-tiled forward.

    x:         [B, D] float32 or bfloat16 (cast in-kernel; never pre-cast here)
    params:    [we1(bf16), be1(f32), we2(bf16), be2(f32),
                wd1(bf16), bd1(f32), wd2(bf16), bd2(f32)]
    tm:        optional explicit batch tile (multiple of 8); auto-chosen otherwise
    max_tile:  upper bound on tm (512 near HBM roofline; raise toward 1024 on
               v7x for very large B)
    out_dtype: float32 (matches the PyTorch module) or bfloat16 (saves ~25% HBM)
    """
    B, D = x.shape
    we1, be1, we2, be2, wd1, bd1, wd2, bd2 = params
    H = we1.shape[1]
    L = we2.shape[1]

    if tm is None:
        tm, Bp, n_steps = _choose_tiling(B, max_tile=max_tile)
    else:
        tm = max(8, _round_up(tm, 8))
        Bp = _round_up(B, tm)
        n_steps = Bp // tm

    if Bp != B:
        # Padded rows pick up bias values but are sliced off before returning.
        x = jnp.pad(x, ((0, Bp - B), (0, 0)))
    grid = (n_steps,)

    out_dtype = jnp.dtype(out_dtype)

    # x / out tiles move with the grid (auto double-buffered by Pallas);
    # weights & biases are grid-invariant and single-buffered.
    x_spec = pl.BlockSpec((tm, D), lambda i: (i, 0))
    out_spec = pl.BlockSpec((tm, D), lambda i: (i, 0))

    def const_spec(a):
        nd = a.ndim
        return pl.BlockSpec(a.shape, lambda i, _nd=nd: (0,) * _nd,
                            pipeline_mode=pl.Buffered(1))

    in_specs = [x_spec] + [const_spec(p) for p in params]

    # ---- VMEM budget (includes bf16 operand copies + f32 out staging) ----
    x_tile_bytes = tm * D * x.dtype.itemsize
    out_tile_bytes = tm * D * out_dtype.itemsize
    weight_bytes = sum(int(p.size) * p.dtype.itemsize for p in params)
    act_f32_bytes = tm * (H + L + H + D) * 4      # h, z, d, out (pre-cast) in f32
    act_bf16_bytes = tm * (D + H + L + H) * 2     # bf16 MXU-operand copies
    needed = (2 * x_tile_bytes + 2 * out_tile_bytes   # double-buffered I/O tiles
              + weight_bytes                          # single-buffered constants
              + act_f32_bytes + act_bf16_bytes)
    # Cap kept under v7x's 64 MiB per-TC physical VMEM (v5e/v6e have 128 MiB).
    vmem_limit = int(min(max(2 * needed, 8 * 1024 * 1024), 48 * 1024 * 1024))

    # ---- Cost estimate so XLA can schedule around the call ----
    flops = 2 * Bp * (D * H + H * L + L * H + H * D)
    bytes_accessed = (Bp * D * x.dtype.itemsize
                      + Bp * D * out_dtype.itemsize
                      + weight_bytes)
    cost = pl.CostEstimate(flops=flops, transcendentals=0,
                           bytes_accessed=bytes_accessed)

    out = pl.pallas_call(
        autoencoder_kernel,
        out_shape=jax.ShapeDtypeStruct((Bp, D), out_dtype),
        grid_spec=pltpu.PrefetchScalarGridSpec(
            num_scalar_prefetch=0,
            grid=grid,
            in_specs=in_specs,
            out_specs=out_spec,
        ),
        compiler_params=pltpu.CompilerParams(
            dimension_semantics=("parallel",),   # batch axis: megacore-friendly
            vmem_limit_bytes=vmem_limit,
        ),
        cost_estimate=cost,
    )(x, *params)

    return out[:B] if Bp != B else out


def init_params(key, dims):
    """Deterministic f32 init: encoder dims then mirrored decoder dims."""
    enc_pairs = list(zip(dims[:-1], dims[1:]))          # e.g. (128,64), (64,32)
    dec_dims = dims[::-1]
    dec_pairs = list(zip(dec_dims[:-1], dec_dims[1:]))  # e.g. (32,64), (64,128)
    params = []
    for (din, dout) in enc_pairs + dec_pairs:
        key, kw = jax.random.split(key)
        scale = (2.0 / din) ** 0.5
        w = scale * jax.random.normal(kw, (din, dout), dtype=jnp.float32)
        b = jnp.zeros((1, dout), dtype=jnp.float32)     # 2-D bias for clean broadcast
        params += [w, b]
    return params


def cast_weights_bf16(params_f32):
    """Pre-cast weight matrices to bf16 (half the DMA / VMEM); biases stay f32."""
    return [p.astype(jnp.bfloat16) if i % 2 == 0 else p
            for i, p in enumerate(params_f32)]


def ref_forward_bf16(x, params_bf16):
    """Plain-JAX reference following the same bf16-operand / f32-accumulate path."""
    we1, be1, we2, be2, wd1, bd1, wd2, bd2 = params_bf16
    bf = jnp.bfloat16
    h = jnp.maximum(
        jnp.dot(x.astype(bf), we1, preferred_element_type=jnp.float32) + be1, 0.0)
    z = jnp.maximum(
        jnp.dot(h.astype(bf), we2, preferred_element_type=jnp.float32) + be2, 0.0)
    d = jnp.maximum(
        jnp.dot(z.astype(bf), wd1, preferred_element_type=jnp.float32) + bd1, 0.0)
    return jnp.dot(d.astype(bf), wd2, preferred_element_type=jnp.float32) + bd2


if __name__ == "__main__":
    # Small shapes consistent with the module:
    #   encoder_dims = [128, 64, 32] -> input feature dim = 128, latent_dim = 32.
    B, D, H, L = 256, 128, 64, 32
    encoder_dims = [D, H, L]

    key = jax.random.PRNGKey(0)
    key, kx, kx2 = jax.random.split(key, 3)
    x = jax.random.normal(kx, (B, D), dtype=jnp.float32)

    params_f32 = init_params(key, encoder_dims)
    params = cast_weights_bf16(params_f32)

    # --- f32 output, auto tiling: B=256 -> tm=64, grid=(4,) (>=2 steps / TC) ---
    out = autoencoder_forward(x, params)
    out = jax.block_until_ready(out)
    assert out.shape == (B, D) and out.dtype == jnp.float32
    ref = ref_forward_bf16(x, params)
    assert jnp.allclose(out, ref, atol=5e-3, rtol=5e-3), (
        float(jnp.max(jnp.abs(out - ref))))

    # --- awkward batch + bf16 output: B=200 -> Bp=224 (minimal padding), bf16 I/O out ---
    B2 = 200
    x2 = jax.random.normal(kx2, (B2, D), dtype=jnp.float32)
    out2 = autoencoder_forward(x2, params, out_dtype=jnp.bfloat16)
    out2 = jax.block_until_ready(out2)
    assert out2.shape == (B2, D) and out2.dtype == jnp.bfloat16
    ref2 = ref_forward_bf16(x2, params)
    assert jnp.allclose(out2.astype(jnp.float32), ref2, atol=6e-2, rtol=2e-2), (
        float(jnp.max(jnp.abs(out2.astype(jnp.float32) - ref2))))

    print("KERNEL_OK")
</pallas_src>

<mosaic_0001>
module attributes {stable_mosaic.version = 11 : i64} {
  func.func @autoencoder_kernel(%arg0: i32, %arg1: memref<64x128xf32, #tpu.memory_space<vmem>>, %arg2: memref<128x64xbf16, #tpu.memory_space<vmem>>, %arg3: memref<1x64xf32, #tpu.memory_space<vmem>>, %arg4: memref<64x32xbf16, #tpu.memory_space<vmem>>, %arg5: memref<1x32xf32, #tpu.memory_space<vmem>>, %arg6: memref<32x64xbf16, #tpu.memory_space<vmem>>, %arg7: memref<1x64xf32, #tpu.memory_space<vmem>>, %arg8: memref<64x128xbf16, #tpu.memory_space<vmem>>, %arg9: memref<1x128xf32, #tpu.memory_space<vmem>>, %arg10: memref<64x128xf32, #tpu.memory_space<vmem>>) attributes {dimension_semantics = [#tpu.dimension_semantics<parallel>], iteration_bounds = array<i64: 4>, scalar_prefetch = 0 : i64, scratch_operands = 0 : i64, tpu.core_type = #tpu.core_type<tc>, window_params = [{transform_indices = @transform_0, window_bounds = array<i64: 64, 128>}, {pipeline_mode = #tpu.pipeline_mode<synchronous>, transform_indices = @transform_1, window_bounds = array<i64: 128, 64>}, {pipeline_mode = #tpu.pipeline_mode<synchronous>, transform_indices = @transform_2, window_bounds = array<i64: 1, 64>}, {pipeline_mode = #tpu.pipeline_mode<synchronous>, transform_indices = @transform_3, window_bounds = array<i64: 64, 32>}, {pipeline_mode = #tpu.pipeline_mode<synchronous>, transform_indices = @transform_4, window_bounds = array<i64: 1, 32>}, {pipeline_mode = #tpu.pipeline_mode<synchronous>, transform_indices = @transform_5, window_bounds = array<i64: 32, 64>}, {pipeline_mode = #tpu.pipeline_mode<synchronous>, transform_indices = @transform_6, window_bounds = array<i64: 1, 64>}, {pipeline_mode = #tpu.pipeline_mode<synchronous>, transform_indices = @transform_7, window_bounds = array<i64: 64, 128>}, {pipeline_mode = #tpu.pipeline_mode<synchronous>, transform_indices = @transform_8, window_bounds = array<i64: 1, 128>}, {transform_indices = @transform_9, window_bounds = array<i64: 64, 128>}]} {
    %c0 = arith.constant 0 : index
    %c0_0 = arith.constant 0 : index
    %0 = vector.load %arg1[%c0, %c0_0] : memref<64x128xf32, #tpu.memory_space<vmem>>, vector<64x128xf32>
    %1 = arith.truncf %0 : vector<64x128xf32> to vector<64x128xbf16>
    %c0_1 = arith.constant 0 : index
    %c0_2 = arith.constant 0 : index
    %2 = vector.load %arg2[%c0_1, %c0_2] : memref<128x64xbf16, #tpu.memory_space<vmem>>, vector<128x64xbf16>
    %cst = arith.constant dense<0.000000e+00> : vector<64x64xf32>
    %3 = tpu.matmul %1, %2, %cst {dimension_numbers = #tpu.dot_dimension_numbers<[1], [0], [0], [1], [0, 0, 1, 1], [], []>} : vector<64x128xbf16>, vector<128x64xbf16>, vector<64x64xf32> -> vector<64x64xf32>
    %c0_3 = arith.constant 0 : index
    %c0_4 = arith.constant 0 : index
    %4 = vector.load %arg3[%c0_3, %c0_4] : memref<1x64xf32, #tpu.memory_space<vmem>>, vector<1x64xf32>
    %5 = vector.broadcast %4 : vector<1x64xf32> to vector<64x64xf32>
    %6 = arith.addf %3, %5 : vector<64x64xf32>
    %cst_5 = arith.constant 0.000000e+00 : f32
    %7 = vector.broadcast %cst_5 : f32 to vector<64x64xf32>
    %8 = arith.maximumf %6, %7 : vector<64x64xf32>
    %9 = arith.truncf %8 : vector<64x64xf32> to vector<64x64xbf16>
    %c0_6 = arith.constant 0 : index
    %c0_7 = arith.constant 0 : index
    %10 = vector.load %arg4[%c0_6, %c0_7] : memref<64x32xbf16, #tpu.memory_space<vmem>>, vector<64x32xbf16>
    %cst_8 = arith.constant dense<0.000000e+00> : vector<64x32xf32>
    %11 = tpu.matmul %9, %10, %cst_8 {dimension_numbers = #tpu.dot_dimension_numbers<[1], [0], [0], [1], [0, 0, 1, 1], [], []>} : vector<64x64xbf16>, vector<64x32xbf16>, vector<64x32xf32> -> vector<64x32xf32>
    %c0_9 = arith.constant 0 : index
    %c0_10 = arith.constant 0 : index
    %12 = vector.load %arg5[%c0_9, %c0_10] : memref<1x32xf32, #tpu.memory_space<vmem>>, vector<1x32xf32>
    %13 = vector.broadcast %12 : vector<1x32xf32> to vector<64x32xf32>
    %14 = arith.addf %11, %13 : vector<64x32xf32>
    %cst_11 = arith.constant 0.000000e+00 : f32
    %15 = vector.broadcast %cst_11 : f32 to vector<64x32xf32>
    %16 = arith.maximumf %14, %15 : vector<64x32xf32>
    %17 = arith.truncf %16 : vector<64x32xf32> to vector<64x32xbf16>
    %c0_12 = arith.constant 0 : index
    %c0_13 = arith.constant 0 : index
    %18 = vector.load %arg6[%c0_12, %c0_13] : memref<32x64xbf16, #tpu.memory_space<vmem>>, vector<32x64xbf16>
    %cst_14 = arith.constant dense<0.000000e+00> : vector<64x64xf32>
    %19 = tpu.matmul %17, %18, %cst_14 {dimension_numbers = #tpu.dot_dimension_numbers<[1], [0], [0], [1], [0, 0, 1, 1], [], []>} : vector<64x32xbf16>, vector<32x64xbf16>, vector<64x64xf32> -> vector<64x64xf32>
    %c0_15 = arith.constant 0 : index
    %c0_16 = arith.constant 0 : index
    %20 = vector.load %arg7[%c0_15, %c0_16] : memref<1x64xf32, #tpu.memory_space<vmem>>, vector<1x64xf32>
    %21 = vector.broadcast %20 : vector<1x64xf32> to vector<64x64xf32>
    %22 = arith.addf %19, %21 : vector<64x64xf32>
    %cst_17 = arith.constant 0.000000e+00 : f32
    %23 = vector.broadcast %cst_17 : f32 to vector<64x64xf32>
    %24 = arith.maximumf %22, %23 : vector<64x64xf32>
    %25 = arith.truncf %24 : vector<64x64xf32> to vector<64x64xbf16>
    %c0_18 = arith.constant 0 : index
    %c0_19 = arith.constant 0 : index
    %26 = vector.load %arg8[%c0_18, %c0_19] : memref<64x128xbf16, #tpu.memory_space<vmem>>, vector<64x128xbf16>
    %cst_20 = arith.constant dense<0.000000e+00> : vector<64x128xf32>
    %27 = tpu.matmul %25, %26, %cst_20 {dimension_numbers = #tpu.dot_dimension_numbers<[1], [0], [0], [1], [0, 0, 1, 1], [], []>} : vector<64x64xbf16>, vector<64x128xbf16>, vector<64x128xf32> -> vector<64x128xf32>
    %c0_21 = arith.constant 0 : index
    %c0_22 = arith.constant 0 : index
    %28 = vector.load %arg9[%c0_21, %c0_22] : memref<1x128xf32, #tpu.memory_space<vmem>>, vector<1x128xf32>
    %29 = vector.broadcast %28 : vector<1x128xf32> to vector<64x128xf32>
    %30 = arith.addf %27, %29 : vector<64x128xf32>
    %c0_23 = arith.constant 0 : index
    %c0_24 = arith.constant 0 : index
    %31 = vector.load %arg10[%c0_23, %c0_24] : memref<64x128xf32, #tpu.memory_space<vmem>>, vector<64x128xf32>
    tpu.vector_store %arg10[%c0_23, %c0_24], %30 {strides = array<i32>} : memref<64x128xf32, #tpu.memory_space<vmem>>, vector<64x128xf32>,
    return
  }
  func.func @transform_0(%arg0: i32) -> (i32, i32) {
    %c0_i32 = arith.constant 0 : i32
    %c0_i32_0 = arith.constant 0 : i32
    return %arg0, %c0_i32 : i32, i32
  }
  func.func @transform_1(%arg0: i32) -> (i32, i32) {
    %c0_i32 = arith.constant 0 : i32
    %c0_i32_0 = arith.constant 0 : i32
    %c0_i32_1 = arith.constant 0 : i32
    return %c0_i32, %c0_i32_0 : i32, i32
  }
  func.func @transform_2(%arg0: i32) -> (i32, i32) {
    %c0_i32 = arith.constant 0 : i32
    %c0_i32_0 = arith.constant 0 : i32
    %c0_i32_1 = arith.constant 0 : i32
    return %c0_i32, %c0_i32_0 : i32, i32
  }
  func.func @transform_3(%arg0: i32) -> (i32, i32) {
    %c0_i32 = arith.constant 0 : i32
    %c0_i32_0 = arith.constant 0 : i32
    %c0_i32_1 = arith.constant 0 : i32
    return %c0_i32, %c0_i32_0 : i32, i32
  }
  func.func @transform_4(%arg0: i32) -> (i32, i32) {
    %c0_i32 = arith.constant 0 : i32
    %c0_i32_0 = arith.constant 0 : i32
    %c0_i32_1 = arith.constant 0 : i32
    return %c0_i32, %c0_i32_0 : i32, i32
  }
  func.func @transform_5(%arg0: i32) -> (i32, i32) {
    %c0_i32 = arith.constant 0 : i32
    %c0_i32_0 = arith.constant 0 : i32
    %c0_i32_1 = arith.constant 0 : i32
    return %c0_i32, %c0_i32_0 : i32, i32
  }
  func.func @transform_6(%arg0: i32) -> (i32, i32) {
    %c0_i32 = arith.constant 0 : i32
    %c0_i32_0 = arith.constant 0 : i32
    %c0_i32_1 = arith.constant 0 : i32
    return %c0_i32, %c0_i32_0 : i32, i32
  }
  func.func @transform_7(%arg0: i32) -> (i32, i32) {
    %c0_i32 = arith.constant 0 : i32
    %c0_i32_0 = arith.constant 0 : i32
    %c0_i32_1 = arith.constant 0 : i32
    return %c0_i32, %c0_i32_0 : i32, i32
  }
  func.func @transform_8(%arg0: i32) -> (i32, i32) {
    %c0_i32 = arith.constant 0 : i32
    %c0_i32_0 = arith.constant 0 : i32
    %c0_i32_1 = arith.constant 0 : i32
    return %c0_i32, %c0_i32_0 : i32, i32
  }
  func.func @transform_9(%arg0: i32) -> (i32, i32) {
    %c0_i32 = arith.constant 0 : i32
    %c0_i32_0 = arith.constant 0 : i32
    return %arg0, %c0_i32 : i32, i32
  }
}

</mosaic_0001>

<llo_original>
// kernel: tpu_custom_call.1
$region0: #{tpu_custom_call.1}
  #allocation0 [shape = 'u32[]', space=smem, size = 0x4, offset = 0x4, fixed_abs, tag = 'smem constant byte address 0x4 - core index']
  #allocation1 [shape = 'u32[72,128]{1,0:T(1,128)}', space=vmem, size = 0x9000, scoped, tag = 'internal scratch']
  %s0 = inlined_call_operand.hbm [shape: f32[256,128], index: 0, kind: input, shape index: {}]
  %s1 = inlined_call_operand.vmem [shape: bf16[128,64], index: 1, kind: input, shape index: {}]
  %s2 = inlined_call_operand.vmem [shape: f32[1,64], index: 2, kind: input, shape index: {}]
  %s3 = inlined_call_operand.vmem [shape: bf16[64,32], index: 3, kind: input, shape index: {}]
  %s4 = inlined_call_operand.vmem [shape: f32[1,32], index: 4, kind: input, shape index: {}]
  %s5 = inlined_call_operand.vmem [shape: bf16[32,64], index: 5, kind: input, shape index: {}]
  %s6 = inlined_call_operand.vmem [shape: f32[1,64], index: 6, kind: input, shape index: {}]
  %s7 = inlined_call_operand.vmem [shape: bf16[64,128], index: 7, kind: input, shape index: {}]
  %s8 = inlined_call_operand.vmem [shape: f32[1,128], index: 8, kind: input, shape index: {}]
  %s9 = inlined_call_operand.hbm [shape: f32[256,128], index: 9, kind: output, shape index: {}]
  %s10 = sld [smem:[#allocation0]]
  $region73: #{tpu_custom_call.1} parent=0
    _
  %s12 = ssub.s32 1, %s10
  %s13 = scalar_select 0, %s12, %s10
  $region1: #{tpu_custom_call.1} parent=0
    #allocation2 [shape = 'u8[65536]{0}', space=vmem, size = 0x10000, scoped, tag = 'input window, operand 0']
    #allocation3 [shape = 's32[2]{0}', space=sflag, size = 0x8, scoped, tag = 'scoped memory for tpu_custom_call.1']
    #allocation4 [shape = 's32[2]{0}', space=sflag, size = 0x8, scoped, tag = 'scoped memory for tpu_custom_call.1']
    #allocation5 [shape = 'u8[65536]{0}', space=vmem, size = 0x10000, scoped, tag = 'output window, operand 0']
    %14 = vsyncpa [#allocation3], 0
    %s15 = scalar_lea.sflag [#allocation3], 1
    %16 = vsyncpa %s15, 0
    %17 = vsyncpa [#allocation4], 0
    %s18 = scalar_lea.sflag [#allocation4], 1
    %19 = vsyncpa %s18, 0
    loop: start=0, step=1, limit=6
    $region2: #{tpu_custom_call.1} parent=1 // loop_pre_header
      _
    $region3: #{tpu_custom_call.1} parent=1 // loop_header
      %s21 = sphi 0, %s25
      %p22 = scmp.ge.s32.totalorder %s21, 6
      %s31 = sphi 0, %s33
      %s34 = sphi 0, %s31
      %s35 = sphi 0, %s34
      %s51 = sphi 0, %s35
      %s55 = sphi 0, %s55
      %s57 = sphi 0, %s55
      %s58 = sphi 0, %s57
      %s72 = sphi 0, %s58
      %s76 = sphi 0, %s76
      %s78 = sphi 0, %s76
      %s79 = sphi 0, %s78
      %s93 = sphi 0, %s79
      %s97 = sphi 0, %s97
      %s99 = sphi 0, %s97
      %s100 = sphi 0, %s99
      %s114 = sphi 0, %s100
      %s118 = sphi 0, %s118
      %s120 = sphi 0, %s118
      %s121 = sphi 0, %s120
      %s135 = sphi 0, %s121
      %s139 = sphi 0, %s139
      %s141 = sphi 0, %s139
      %s142 = sphi 0, %s141
      %s156 = sphi 0, %s142
      %s160 = sphi 0, %s160
      %s162 = sphi 0, %s160
      %s163 = sphi 0, %s162
      %s177 = sphi 0, %s163
      %s181 = sphi 0, %s181
      %s183 = sphi 0, %s181
      %s184 = sphi 0, %s183
      %s198 = sphi 0, %s184
      %s202 = sphi 0, %s202
      %s204 = sphi 0, %s202
      %s205 = sphi 0, %s204
      %s219 = sphi 0, %s205
      %s225 = sphi 0, %s227
      %s228 = sphi 0, %s225
      %s229 = sphi 0, %s228
      %s245 = sphi 0, %s229
    $region4: #{tpu_custom_call.1} parent=1 // loop_header_branch
      %24 = sbr.rel (%p22) target = $region8
    $region5: #{tpu_custom_call.1} parent=1 // loop_body
      %s26 = ssub.s32 %s21, 1
      %s27 = ssub.s32 %s21, 2
      %s28 = sadd.s32 %s21, 1
      %s29 = ssub.s32 %s21, %s28
      %p30 = scmp.eq.s32.totalorder %s29, 0
      %s32 = sadd.s32 %s31, 1
      %s33 = scalar_select %p30, %s31, %s32
      %p36 = pneg %p30
      %p37 = scmp.eq.s32.totalorder %s21, 3
      %p38 = por %p36, %p37
      %p39 = scmp.ne.s32.totalorder %s31, %s34
      %p40 = scmp.eq.s32.totalorder %s21, 0
      %p41 = por %p39, %p40
      %p42 = scmp.ne.s32.totalorder %s31, %s34
      %p43 = scmp.eq.s32.totalorder %s26, 3
      %p44 = por %p42, %p43
      %p45 = scmp.ne.s32.totalorder %s34, %s35
      %p46 = scmp.eq.s32.totalorder %s26, 0
      %p47 = por %p45, %p46
      %p48 = scmp.ne.s32.totalorder %s34, %s35
      %p49 = scmp.eq.s32.totalorder %s27, 3
      %p50 = por %p48, %p49
      %p52 = scmp.ne.s32.totalorder %s35, %s51
      %p53 = scmp.eq.s32.totalorder %s27, 0
      %p54 = por %p52, %p53
      %s56 = sadd.s32 %s55, 1
      %p59 = scmp.eq.s32.totalorder %s21, 3
      %p60 = scmp.ne.s32.totalorder %s55, %s57
      %p61 = scmp.eq.s32.totalorder %s21, 0
      %p62 = por %p60, %p61
      %p63 = scmp.ne.s32.totalorder %s55, %s57
      %p64 = scmp.eq.s32.totalorder %s26, 3
      %p65 = por %p63, %p64
      %p66 = scmp.ne.s32.totalorder %s57, %s58
      %p67 = scmp.eq.s32.totalorder %s26, 0
      %p68 = por %p66, %p67
      %p69 = scmp.ne.s32.totalorder %s57, %s58
      %p70 = scmp.eq.s32.totalorder %s27, 3
      %p71 = por %p69, %p70
      %p73 = scmp.ne.s32.totalorder %s58, %s72
      %p74 = scmp.eq.s32.totalorder %s27, 0
      %p75 = por %p73, %p74
      %s77 = sadd.s32 %s76, 1
      %p80 = scmp.eq.s32.totalorder %s21, 3
      %p81 = scmp.ne.s32.totalorder %s76, %s78
      %p82 = scmp.eq.s32.totalorder %s21, 0
      %p83 = por %p81, %p82
      %p84 = scmp.ne.s32.totalorder %s76, %s78
      %p85 = scmp.eq.s32.totalorder %s26, 3
      %p86 = por %p84, %p85
      %p87 = scmp.ne.s32.totalorder %s78, %s79
      %p88 = scmp.eq.s32.totalorder %s26, 0
      %p89 = por %p87, %p88
      %p90 = scmp.ne.s32.totalorder %s78, %s79
      %p91 = scmp.eq.s32.totalorder %s27, 3
      %p92 = por %p90, %p91
      %p94 = scmp.ne.s32.totalorder %s79, %s93
      %p95 = scmp.eq.s32.totalorder %s27, 0
      %p96 = por %p94, %p95
      %s98 = sadd.s32 %s97, 1
      %p101 = scmp.eq.s32.totalorder %s21, 3
      %p102 = scmp.ne.s32.totalorder %s97, %s99
      %p103 = scmp.eq.s32.totalorder %s21, 0
      %p104 = por %p102, %p103
      %p105 = scmp.ne.s32.totalorder %s97, %s99
      %p106 = scmp.eq.s32.totalorder %s26, 3
      %p107 = por %p105, %p106
      %p108 = scmp.ne.s32.totalorder %s99, %s100
      %p109 = scmp.eq.s32.totalorder %s26, 0
      %p110 = por %p108, %p109
      %p111 = scmp.ne.s32.totalorder %s99, %s100
      %p112 = scmp.eq.s32.totalorder %s27, 3
      %p113 = por %p111, %p112
      %p115 = scmp.ne.s32.totalorder %s100, %s114
      %p116 = scmp.eq.s32.totalorder %s27, 0
      %p117 = por %p115, %p116
      %s119 = sadd.s32 %s118, 1
      %p122 = scmp.eq.s32.totalorder %s21, 3
      %p123 = scmp.ne.s32.totalorder %s118, %s120
      %p124 = scmp.eq.s32.totalorder %s21, 0
      %p125 = por %p123, %p124
      %p126 = scmp.ne.s32.totalorder %s118, %s120
      %p127 = scmp.eq.s32.totalorder %s26, 3
      %p128 = por %p126, %p127
      %p129 = scmp.ne.s32.totalorder %s120, %s121
      %p130 = scmp.eq.s32.totalorder %s26, 0
      %p131 = por %p129, %p130
      %p132 = scmp.ne.s32.totalorder %s120, %s121
      %p133 = scmp.eq.s32.totalorder %s27, 3
      %p134 = por %p132, %p133
      %p136 = scmp.ne.s32.totalorder %s121, %s135
      %p137 = scmp.eq.s32.totalorder %s27, 0
      %p138 = por %p136, %p137
      %s140 = sadd.s32 %s139, 1
      %p143 = scmp.eq.s32.totalorder %s21, 3
      %p144 = scmp.ne.s32.totalorder %s139, %s141
      %p145 = scmp.eq.s32.totalorder %s21, 0
      %p146 = por %p144, %p145
      %p147 = scmp.ne.s32.totalorder %s139, %s141
      %p148 = scmp.eq.s32.totalorder %s26, 3
      %p149 = por %p147, %p148
      %p150 = scmp.ne.s32.totalorder %s141, %s142
      %p151 = scmp.eq.s32.totalorder %s26, 0
      %p152 = por %p150, %p151
      %p153 = scmp.ne.s32.totalorder %s141, %s142
      %p154 = scmp.eq.s32.totalorder %s27, 3
      %p155 = por %p153, %p154
      %p157 = scmp.ne.s32.totalorder %s142, %s156
      %p158 = scmp.eq.s32.totalorder %s27, 0
      %p159 = por %p157, %p158
      %s161 = sadd.s32 %s160, 1
      %p164 = scmp.eq.s32.totalorder %s21, 3
      %p165 = scmp.ne.s32.totalorder %s160, %s162
      %p166 = scmp.eq.s32.totalorder %s21, 0
      %p167 = por %p165, %p166
      %p168 = scmp.ne.s32.totalorder %s160, %s162
      %p169 = scmp.eq.s32.totalorder %s26, 3
      %p170 = por %p168, %p169
      %p171 = scmp.ne.s32.totalorder %s162, %s163
      %p172 = scmp.eq.s32.totalorder %s26, 0
      %p173 = por %p171, %p172
      %p174 = scmp.ne.s32.totalorder %s162, %s163
      %p175 = scmp.eq.s32.totalorder %s27, 3
      %p176 = por %p174, %p175
      %p178 = scmp.ne.s32.totalorder %s163, %s177
      %p179 = scmp.eq.s32.totalorder %s27, 0
      %p180 = por %p178, %p179
      %s182 = sadd.s32 %s181, 1
      %p185 = scmp.eq.s32.totalorder %s21, 3
      %p186 = scmp.ne.s32.totalorder %s181, %s183
      %p187 = scmp.eq.s32.totalorder %s21, 0
      %p188 = por %p186, %p187
      %p189 = scmp.ne.s32.totalorder %s181, %s183
      %p190 = scmp.eq.s32.totalorder %s26, 3
      %p191 = por %p189, %p190
      %p192 = scmp.ne.s32.totalorder %s183, %s184
      %p193 = scmp.eq.s32.totalorder %s26, 0
      %p194 = por %p192, %p193
      %p195 = scmp.ne.s32.totalorder %s183, %s184
      %p196 = scmp.eq.s32.totalorder %s27, 3
      %p197 = por %p195, %p196
      %p199 = scmp.ne.s32.totalorder %s184, %s198
      %p200 = scmp.eq.s32.totalorder %s27, 0
      %p201 = por %p199, %p200
      %s203 = sadd.s32 %s202, 1
      %p206 = scmp.eq.s32.totalorder %s21, 3
      %p207 = scmp.ne.s32.totalorder %s202, %s204
      %p208 = scmp.eq.s32.totalorder %s21, 0
      %p209 = por %p207, %p208
      %p210 = scmp.ne.s32.totalorder %s202, %s204
      %p211 = scmp.eq.s32.totalorder %s26, 3
      %p212 = por %p210, %p211
      %p213 = scmp.ne.s32.totalorder %s204, %s205
      %p214 = scmp.eq.s32.totalorder %s26, 0
      %p215 = por %p213, %p214
      %p216 = scmp.ne.s32.totalorder %s204, %s205
      %p217 = scmp.eq.s32.totalorder %s27, 3
      %p218 = por %p216, %p217
      %p220 = scmp.ne.s32.totalorder %s205, %s219
      %p221 = scmp.eq.s32.totalorder %s27, 0
      %p222 = por %p220, %p221
      %s223 = ssub.s32 %s21, %s28
      %p224 = scmp.eq.s32.totalorder %s223, 0
      %s226 = sadd.s32 %s225, 1
      %s227 = scalar_select %p224, %s225, %s226
      %p230 = pneg %p224
      %p231 = scmp.eq.s32.totalorder %s21, 3
      %p232 = por %p230, %p231
      %p233 = scmp.ne.s32.totalorder %s225, %s228
      %p234 = scmp.eq.s32.totalorder %s21, 0
      %p235 = por %p233, %p234
      %p236 = scmp.ne.s32.totalorder %s225, %s228
      %p237 = scmp.eq.s32.totalorder %s26, 3
      %p238 = por %p236, %p237
      %p239 = scmp.ne.s32.totalorder %s228, %s229
      %p240 = scmp.eq.s32.totalorder %s26, 0
      %p241 = por %p239, %p240
      %p242 = scmp.ne.s32.totalorder %s228, %s229
      %p243 = scmp.eq.s32.totalorder %s27, 3
      %p244 = por %p242, %p243
      %p246 = scmp.ne.s32.totalorder %s229, %s245
      %p247 = scmp.eq.s32.totalorder %s27, 0
      %p248 = por %p246, %p247
      %p249 = scmp.le.s32.totalorder 1, %s21
      %p250 = scmp.lt.s32.totalorder %s21, 5
      %p251 = pnand %p249, %p250
      %p252 = pneg %p251
      // Predicated region
      $region9: #{tpu_custom_call.1} parent=5 // pred_check
        _
      $region10: #{tpu_custom_call.1} parent=5 // pred_check_branch
        %254 = sbr.rel (%p251) target = $region12
      $region11: #{tpu_custom_call.1} parent=5 // pred_region
        %s255 = ssub.s32 %s21, 1
        // Predicated region
        $region13: #{tpu_custom_call.1} parent=11 // pred_check
          %p256 = pneg %p68
        $region14: #{tpu_custom_call.1} parent=11 // pred_check_branch
          %258 = sbr.rel (%p256) target = $region16
        $region15: #{tpu_custom_call.1} parent=11 // pred_region
          _
        $region16: #{tpu_custom_call.1} parent=11 // pred_fallthru
          _
        // Predicated region
        $region17: #{tpu_custom_call.1} parent=11 // pred_check
          %p259 = pneg %p89
        $region18: #{tpu_custom_call.1} parent=11 // pred_check_branch
          %261 = sbr.rel (%p259) target = $region20
        $region19: #{tpu_custom_call.1} parent=11 // pred_region
          _
        $region20: #{tpu_custom_call.1} parent=11 // pred_fallthru
          _
        // Predicated region
        $region21: #{tpu_custom_call.1} parent=11 // pred_check
          %p262 = pneg %p110
        $region22: #{tpu_custom_call.1} parent=11 // pred_check_branch
          %264 = sbr.rel (%p262) target = $region24
        $region23: #{tpu_custom_call.1} parent=11 // pred_region
          _
        $region24: #{tpu_custom_call.1} parent=11 // pred_fallthru
          _
        // Predicated region
        $region25: #{tpu_custom_call.1} parent=11 // pred_check
          %p265 = pneg %p131
        $region26: #{tpu_custom_call.1} parent=11 // pred_check_branch
          %267 = sbr.rel (%p265) target = $region28
        $region27: #{tpu_custom_call.1} parent=11 // pred_region
          _
        $region28: #{tpu_custom_call.1} parent=11 // pred_fallthru
          _
        // Predicated region
        $region29: #{tpu_custom_call.1} parent=11 // pred_check
          %p268 = pneg %p152
        $region30: #{tpu_custom_call.1} parent=11 // pred_check_branch
          %270 = sbr.rel (%p268) target = $region32
        $region31: #{tpu_custom_call.1} parent=11 // pred_region
          _
        $region32: #{tpu_custom_call.1} parent=11 // pred_fallthru
          _
        // Predicated region
        $region33: #{tpu_custom_call.1} parent=11 // pred_check
          %p271 = pneg %p173
        $region34: #{tpu_custom_call.1} parent=11 // pred_check_branch
          %273 = sbr.rel (%p271) target = $region36
        $region35: #{tpu_custom_call.1} parent=11 // pred_region
          _
        $region36: #{tpu_custom_call.1} parent=11 // pred_fallthru
          _
        // Predicated region
        $region37: #{tpu_custom_call.1} parent=11 // pred_check
          %p274 = pneg %p194
        $region38: #{tpu_custom_call.1} parent=11 // pred_check_branch
          %276 = sbr.rel (%p274) target = $region40
        $region39: #{tpu_custom_call.1} parent=11 // pred_region
          _
        $region40: #{tpu_custom_call.1} parent=11 // pred_fallthru
          _
        // Predicated region
        $region41: #{tpu_custom_call.1} parent=11 // pred_check
          %p277 = pneg %p215
        $region42: #{tpu_custom_call.1} parent=11 // pred_check_branch
          %279 = sbr.rel (%p277) target = $region44
        $region43: #{tpu_custom_call.1} parent=11 // pred_region
          _
        $region44: #{tpu_custom_call.1} parent=11 // pred_fallthru
          _
      $region12: #{tpu_custom_call.1} parent=5 // pred_fallthru
        _
      %p280 = scmp.lt.s32.totalorder %s21, 4
      // Predicated region
      $region45: #{tpu_custom_call.1} parent=5 // pred_check
        %p281 = pneg %p280
      $region46: #{tpu_custom_call.1} parent=5 // pred_check_branch
        %283 = sbr.rel (%p281) target = $region48
      $region47: #{tpu_custom_call.1} parent=5 // pred_region
        // Predicated region
        $region49: #{tpu_custom_call.1} parent=47 // pred_check
          %p284 = pneg %p41
        $region50: #{tpu_custom_call.1} parent=47 // pred_check_branch
          %286 = sbr.rel (%p284) target = $region52
        $region51: #{tpu_custom_call.1} parent=47 // pred_region
          %s287 = sand.u32 %s31, 1
          %s288 = scalar_lea.sflag [#allocation3], %s287
          %s289 = sand.u32 %s31, 1
          %s290 = smul.addr %s289, 64
          %s291 = scalar_lea.vmem [#allocation2], %s290
          %s292 = smul.u32 8, %s21
          %294 = vsyncadd %s288, 0
          %s295 = smul.addr %s292, 8
          %s296 = scalar_lea.hbm %s0, %s295
          %s297 = sshll.u32 %s296, 4
          %s298 = int_to_ptr.hbm [resolvable:$true] %s297
          %s299 = sshll.u32 %s291, 4
          %s300 = int_to_ptr.vmem [resolvable:$true] %s299
          %305 = dma.hbm_to_vmem [thread:$0]  %s298, 1024, %s300, %s288, 128, 128, 8
        $region52: #{tpu_custom_call.1} parent=47 // pred_fallthru
          _
      $region48: #{tpu_custom_call.1} parent=5 // pred_fallthru
        _
      %p306 = scmp.le.s32.totalorder 1, %s21
      %p307 = scmp.lt.s32.totalorder %s21, 5
      %p308 = pnand %p306, %p307
      %p309 = pneg %p308
      // Predicated region
      $region53: #{tpu_custom_call.1} parent=5 // pred_check
        _
      $region54: #{tpu_custom_call.1} parent=5 // pred_check_branch
        %311 = sbr.rel (%p308) target = $region56
      $region55: #{tpu_custom_call.1} parent=5 // pred_region
        %s312 = ssub.s32 %s21, 1
        %s313 = sand.u32 %s34, 1
        %s314 = scalar_lea.sflag [#allocation3], %s313
        %s315 = sand.u32 %s34, 1
        %s316 = smul.addr %s315, 64
        %s317 = scalar_lea.vmem [#allocation2], %s316
        // Predicated region
        $region57: #{tpu_custom_call.1} parent=55 // pred_check
          %p318 = pneg %p47
        $region58: #{tpu_custom_call.1} parent=55 // pred_check_branch
          %320 = sbr.rel (%p318) target = $region60
        $region59: #{tpu_custom_call.1} parent=55 // pred_region
          %322 = dma.done %s314, 1024
        $region60: #{tpu_custom_call.1} parent=55 // pred_fallthru
          _
        %s323 = sand.u32 %s34, 1
        %s324 = scalar_lea.sflag [#allocation3], %s323
        %s325 = sand.u32 %s34, 1
        %s326 = smul.addr %s325, 64
        %s327 = scalar_lea.vmem [#allocation2], %s326
        %p328 = pneg %p47
        %p329 = pneg %p44
        %p330 = pneg %p68
        %p331 = pneg %p65
        %p332 = pneg %p89
        %p333 = pneg %p86
        %p334 = pneg %p110
        %p335 = pneg %p107
        %p336 = pneg %p131
        %p337 = pneg %p128
        %p338 = pneg %p152
        %p339 = pneg %p149
        %p340 = pneg %p173
        %p341 = pneg %p170
        %p342 = pneg %p194
        %p343 = pneg %p191
        %p344 = pneg %p215
        %p345 = pneg %p212
        %p346 = pneg %p241
        %p347 = pneg %p238
        %s348 = sand.u32 %s228, 1
        %s349 = scalar_lea.sflag [#allocation4], %s348
        %s350 = sand.u32 %s228, 1
        %s351 = smul.addr %s350, 64
        %s352 = scalar_lea.vmem [#allocation5], %s351
        %s353 = smul.u32 8, %s26
        %s354 = smul.u32 8, %s26
        %v356 = vld [vmem:[%s317] sm:$0xff]
        %v357 = vld [vmem:[%s317 + $0x8] sm:$0xff]
        %v358 = vld [vmem:[%s317 + $0x10] sm:$0xff]
        %v359 = vld [vmem:[%s317 + $0x18] sm:$0xff]
        %v360 = vld [vmem:[%s317 + $0x20] sm:$0xff]
        %v361 = vld [vmem:[%s317 + $0x28] sm:$0xff]
        %v362 = vld [vmem:[%s317 + $0x30] sm:$0xff]
        %v363 = vld [vmem:[%s317 + $0x38] sm:$0xff]
        %v364 = vpack.c.bf16 %v357, %v356
        %v365 = vpack.c.bf16 %v359, %v358
        %v366 = vpack.c.bf16 %v361, %v360
        %v367 = vpack.c.bf16 %v363, %v362
        %v368 = vld [vmem:[%s1] sm:$0xf]
        %v369 = vld [vmem:[%s1 + $0x4] sm:$0xf]
        %v370 = vld [vmem:[%s1 + $0x8] sm:$0xf]
        %v371 = vld [vmem:[%s1 + $0xc] sm:$0xf]
        %v372 = vld [vmem:[%s1 + $0x10] sm:$0xf]
        %v373 = vld [vmem:[%s1 + $0x14] sm:$0xf]
        %v374 = vld [vmem:[%s1 + $0x18] sm:$0xf]
        %v375 = vld [vmem:[%s1 + $0x1c] sm:$0xf]
        %v376 = vld [vmem:[%s1 + $0x20] sm:$0xf]
        %v377 = vld [vmem:[%s1 + $0x24] sm:$0xf]
        %v378 = vld [vmem:[%s1 + $0x28] sm:$0xf]
        %v379 = vld [vmem:[%s1 + $0x2c] sm:$0xf]
        %v380 = vld [vmem:[%s1 + $0x30] sm:$0xf]
        %v381 = vld [vmem:[%s1 + $0x34] sm:$0xf]
        %v382 = vld [vmem:[%s1 + $0x38] sm:$0xf]
        %v383 = vld [vmem:[%s1 + $0x3c] sm:$0xf]
        %v384 = vld [vmem:[%s2] sm:$0x1]
        %v386 = vperm.slane %v384, 0
        %v404 = vunpack.c.l.b16 %v368
        %v405 = vunpack.c.l.b16 %v369
        %v406 = vunpack.c.l.b16 %v370
        %v407 = vunpack.c.l.b16 %v371
        %v408 = vunpack.c.l.b16 %v372
        %v409 = vunpack.c.l.b16 %v373
        %v410 = vunpack.c.l.b16 %v374
        %v411 = vunpack.c.l.b16 %v375
        %v412 = vunpack.c.l.b16 %v376
        %v413 = vunpack.c.l.b16 %v377
        %v414 = vunpack.c.l.b16 %v378
        %v415 = vunpack.c.l.b16 %v379
        %v416 = vunpack.c.l.b16 %v380
        %v417 = vunpack.c.l.b16 %v381
        %v418 = vunpack.c.l.b16 %v382
        %v419 = vunpack.c.l.b16 %v383
        %v420 = vpack.c.b16 %v405, %v404
        %v421 = vpack.c.b16 %v407, %v406
        %v422 = vpack.c.b16 %v409, %v408
        %v423 = vpack.c.b16 %v411, %v410
        %v424 = vpack.c.b16 %v413, %v412
        %v425 = vpack.c.b16 %v415, %v414
        %v426 = vpack.c.b16 %v417, %v416
        %v427 = vpack.c.b16 %v419, %v418
        %436 = vmatpush.bf16.msra.mxu0 %v427
        %437 = vmatpush.bf16.msra.mxu0 %v426
        %438 = vmatpush.bf16.msra.mxu0 %v425
        %439 = vmatpush.bf16.msra.mxu0 %v424
        %440 = vmatpush.bf16.msra.mxu0 %v423
        %441 = vmatpush.bf16.msra.mxu0 %v422
        %442 = vmatpush.bf16.msra.mxu0 %v421
        %443 = vmatpush.bf16.msra.mxu0 %v420
        %444 = vmatmul.bf16.gmra.mxu0 %v364
        %v445 = vpop.f32.mrf.mxu0
        %v446 = vadd.f32 %v386, %v445
        %v447 = vpop.f32.mrf.mxu0
        %v448 = vadd.f32 %v386, %v447
        %449 = vmatmul.bf16.gmra.mxu0 %v365
        %v450 = vpop.f32.mrf.mxu0
        %v451 = vadd.f32 %v386, %v450
        %v452 = vpop.f32.mrf.mxu0
        %v453 = vadd.f32 %v386, %v452
        %454 = vmatmul.bf16.gmra.mxu0 %v366
        %v455 = vpop.f32.mrf.mxu0
        %v456 = vadd.f32 %v386, %v455
        %v457 = vpop.f32.mrf.mxu0
        %v458 = vadd.f32 %v386, %v457
        %459 = vmatmul.bf16.gmra.mxu0 %v367
        %v460 = vpop.f32.mrf.mxu0
        %v461 = vadd.f32 %v386, %v460
        %v462 = vpop.f32.mrf.mxu0
        %v463 = vadd.f32 %v386, %v462
        %464 = vdwg.mxu0
        %v465 = vmax.f32 %v446, 0.0
        %v466 = vmax.f32 %v448, 0.0
        %v467 = vmax.f32 %v451, 0.0
        %v468 = vmax.f32 %v453, 0.0
        %v469 = vmax.f32 %v456, 0.0
        %v470 = vmax.f32 %v458, 0.0
        %v471 = vmax.f32 %v461, 0.0
        %v472 = vmax.f32 %v463, 0.0
        %v473 = vpack.c.bf16 %v466, %v465
        %v474 = vpack.c.bf16 %v468, %v467
        %v475 = vpack.c.bf16 %v470, %v469
        %v476 = vpack.c.bf16 %v472, %v471
        %v477 = vld [vmem:[%s3] sm:$0xf]
        %v478 = vld [vmem:[%s3 + $0x4] sm:$0xf]
        %v479 = vld [vmem:[%s3 + $0x8] sm:$0xf]
        %v480 = vld [vmem:[%s3 + $0xc] sm:$0xf]
        %v481 = vld [vmem:[%s3 + $0x10] sm:$0xf]
        %v482 = vld [vmem:[%s3 + $0x14] sm:$0xf]
        %v483 = vld [vmem:[%s3 + $0x18] sm:$0xf]
        %v484 = vld [vmem:[%s3 + $0x1c] sm:$0xf]
        %v485 = vld [vmem:[%s4] sm:$0x1]
        %v487 = vperm.slane %v485, 0
        %v497 = vunpack.c.l.b16 %v477
        %v498 = vunpack.c.l.b16 %v478
        %v499 = vunpack.c.l.b16 %v479
        %v500 = vunpack.c.l.b16 %v480
        %v501 = vunpack.c.l.b16 %v481
        %v502 = vunpack.c.l.b16 %v482
        %v503 = vunpack.c.l.b16 %v483
        %v504 = vunpack.c.l.b16 %v484
        %v505 = vpack.c.b16 %v498, %v497
        %v506 = vpack.c.b16 %v500, %v499
        %v507 = vpack.c.b16 %v502, %v501
        %v508 = vpack.c.b16 %v504, %v503
        %vm513 = vcmask 523264
        %v515 = vsel %vm513, %v473, 0
        %v518 = vsel %vm513, %v474, 0
        %v521 = vsel %vm513, %v475, 0
        %v524 = vsel %vm513, %v476, 0
        %526 = vmatpush.bf16.msra.mxu0 0
        %527 = vmatpush.bf16.msra.mxu0 0
        %528 = vmatpush.bf16.msra.mxu0 0
        %529 = vmatpush.bf16.msra.mxu0 0
        %530 = vmatpush.bf16.msra.mxu0 %v508
        %531 = vmatpush.bf16.msra.mxu0 %v507
        %532 = vmatpush.bf16.msra.mxu0 %v506
        %533 = vmatpush.bf16.msra.mxu0 %v505
        %534 = vmatmul.bf16.gmra.mxu0 %v515
        %v535 = vpop.f32.mrf.mxu0
        %v536 = vadd.f32 %v487, %v535
        %v537 = vpop.f32.mrf.mxu0
        %v538 = vadd.f32 %v487, %v537
        %539 = vmatmul.bf16.gmra.mxu0 %v518
        %v540 = vpop.f32.mrf.mxu0
        %v541 = vadd.f32 %v487, %v540
        %v542 = vpop.f32.mrf.mxu0
        %v543 = vadd.f32 %v487, %v542
        %544 = vmatmul.bf16.gmra.mxu0 %v521
        %v545 = vpop.f32.mrf.mxu0
        %v546 = vadd.f32 %v487, %v545
        %v547 = vpop.f32.mrf.mxu0
        %v548 = vadd.f32 %v487, %v547
        %549 = vmatmul.bf16.gmra.mxu0 %v524
        %v550 = vpop.f32.mrf.mxu0
        %v551 = vadd.f32 %v487, %v550
        %v552 = vpop.f32.mrf.mxu0
        %v553 = vadd.f32 %v487, %v552
        %554 = vdwg.mxu0
        %v555 = vmax.f32 %v536, 0.0
        %v556 = vmax.f32 %v538, 0.0
        %v557 = vmax.f32 %v541, 0.0
        %v558 = vmax.f32 %v543, 0.0
        %v559 = vmax.f32 %v546, 0.0
        %v560 = vmax.f32 %v548, 0.0
        %v561 = vmax.f32 %v551, 0.0
        %v562 = vmax.f32 %v553, 0.0
        %v563 = vpack.c.bf16 %v556, %v555
        %v564 = vpack.c.bf16 %v558, %v557
        %v565 = vpack.c.bf16 %v560, %v559
        %v566 = vpack.c.bf16 %v562, %v561
        %v567 = vld [vmem:[%s5] sm:$0xf]
        %v568 = vld [vmem:[%s5 + $0x4] sm:$0xf]
        %v569 = vld [vmem:[%s5 + $0x8] sm:$0xf]
        %v570 = vld [vmem:[%s5 + $0xc] sm:$0xf]
        %v571 = vld [vmem:[%s6] sm:$0x1]
        %v573 = vperm.slane %v571, 0
        %v579 = vunpack.c.l.b16 %v567
        %v580 = vunpack.c.l.b16 %v568
        %v581 = vunpack.c.l.b16 %v569
        %v582 = vunpack.c.l.b16 %v570
        %v583 = vpack.c.b16 %v580, %v579
        %v584 = vpack.c.b16 %v582, %v581
        %vm587 = vcmask 261120
        %v589 = vsel %vm587, %v563, 0
        %v592 = vsel %vm587, %v564, 0
        %v595 = vsel %vm587, %v565, 0
        %v598 = vsel %vm587, %v566, 0
        %600 = vmatpush.bf16.msra.mxu0 0
        %601 = vmatpush.bf16.msra.mxu0 0
        %602 = vmatpush.bf16.msra.mxu0 0
        %603 = vmatpush.bf16.msra.mxu0 0
        %604 = vmatpush.bf16.msra.mxu0 0
        %605 = vmatpush.bf16.msra.mxu0 0
        %606 = vmatpush.bf16.msra.mxu0 %v584
        %607 = vmatpush.bf16.msra.mxu0 %v583
        %608 = vmatmul.bf16.gmra.mxu0 %v589
        %v609 = vpop.f32.mrf.mxu0
        %v610 = vadd.f32 %v573, %v609
        %v611 = vpop.f32.mrf.mxu0
        %v612 = vadd.f32 %v573, %v611
        %613 = vmatmul.bf16.gmra.mxu0 %v592
        %v614 = vpop.f32.mrf.mxu0
        %v615 = vadd.f32 %v573, %v614
        %v616 = vpop.f32.mrf.mxu0
        %v617 = vadd.f32 %v573, %v616
        %618 = vmatmul.bf16.gmra.mxu0 %v595
        %v619 = vpop.f32.mrf.mxu0
        %v620 = vadd.f32 %v573, %v619
        %v621 = vpop.f32.mrf.mxu0
        %v622 = vadd.f32 %v573, %v621
        %623 = vmatmul.bf16.gmra.mxu0 %v598
        %v624 = vpop.f32.mrf.mxu0
        %v625 = vadd.f32 %v573, %v624
        %v626 = vpop.f32.mrf.mxu0
        %v627 = vadd.f32 %v573, %v626
        %628 = vdwg.mxu0
        %v629 = vmax.f32 %v610, 0.0
        %v630 = vmax.f32 %v612, 0.0
        %v631 = vmax.f32 %v615, 0.0
        %v632 = vmax.f32 %v617, 0.0
        %v633 = vmax.f32 %v620, 0.0
        %v634 = vmax.f32 %v622, 0.0
        %v635 = vmax.f32 %v625, 0.0
        %v636 = vmax.f32 %v627, 0.0
        %v637 = vpack.c.bf16 %v630, %v629
        %v638 = vpack.c.bf16 %v632, %v631
        %v639 = vpack.c.bf16 %v634, %v633
        %v640 = vpack.c.bf16 %v636, %v635
        %v641 = vld [vmem:[%s7] sm:$0xf]
        %v642 = vld [vmem:[%s7 + $0x4] sm:$0xf]
        %v643 = vld [vmem:[%s7 + $0x8] sm:$0xf]
        %v644 = vld [vmem:[%s7 + $0xc] sm:$0xf]
        %v645 = vld [vmem:[%s7 + $0x10] sm:$0xf]
        %v646 = vld [vmem:[%s7 + $0x14] sm:$0xf]
        %v647 = vld [vmem:[%s7 + $0x18] sm:$0xf]
        %v648 = vld [vmem:[%s7 + $0x1c] sm:$0xf]
        %v649 = vld [vmem:[%s8] sm:$0x1]
        %v651 = vperm.slane %v649, 0
        %v661 = vunpack.c.l.b16 %v641
        %v662 = vunpack.c.l.b16 %v642
        %v663 = vunpack.c.l.b16 %v643
        %v664 = vunpack.c.l.b16 %v644
        %v665 = vunpack.c.l.b16 %v645
        %v666 = vunpack.c.l.b16 %v646
        %v667 = vunpack.c.l.b16 %v647
        %v668 = vunpack.c.l.b16 %v648
        %v669 = vpack.c.b16 %v662, %v661
        %v670 = vpack.c.b16 %v664, %v663
        %v671 = vpack.c.b16 %v666, %v665
        %v672 = vpack.c.b16 %v668, %v667
        %v678 = vsel %vm513, %v637, 0
        %v681 = vsel %vm513, %v638, 0
        %v684 = vsel %vm513, %v639, 0
        %v687 = vsel %vm513, %v640, 0
        %689 = vmatpush.bf16.msra.mxu0 0
        %690 = vmatpush.bf16.msra.mxu0 0
        %691 = vmatpush.bf16.msra.mxu0 0
        %692 = vmatpush.bf16.msra.mxu0 0
        %693 = vmatpush.bf16.msra.mxu0 %v672
        %694 = vmatpush.bf16.msra.mxu0 %v671
        %695 = vmatpush.bf16.msra.mxu0 %v670
        %696 = vmatpush.bf16.msra.mxu0 %v669
        %697 = vmatmul.bf16.gmra.mxu0 %v678
        %v698 = vpop.f32.mrf.mxu0
        %v699 = vadd.f32 %v651, %v698
        %v700 = vpop.f32.mrf.mxu0
        %v701 = vadd.f32 %v651, %v700
        %702 = vmatmul.bf16.gmra.mxu0 %v681
        %v703 = vpop.f32.mrf.mxu0
        %v704 = vadd.f32 %v651, %v703
        %v705 = vpop.f32.mrf.mxu0
        %v706 = vadd.f32 %v651, %v705
        %707 = vmatmul.bf16.gmra.mxu0 %v684
        %v708 = vpop.f32.mrf.mxu0
        %v709 = vadd.f32 %v651, %v708
        %v710 = vpop.f32.mrf.mxu0
        %v711 = vadd.f32 %v651, %v710
        %712 = vmatmul.bf16.gmra.mxu0 %v687
        %v713 = vpop.f32.mrf.mxu0
        %v714 = vadd.f32 %v651, %v713
        %v715 = vpop.f32.mrf.mxu0
        %v716 = vadd.f32 %v651, %v715
        %717 = vdwg.mxu0
        %718 = vst [vmem:[%s352] sm:$0xff] %v699
        %719 = vst [vmem:[%s352 + $0x8] sm:$0xff] %v701
        %720 = vst [vmem:[%s352 + $0x10] sm:$0xff] %v704
        %721 = vst [vmem:[%s352 + $0x18] sm:$0xff] %v706
        %722 = vst [vmem:[%s352 + $0x20] sm:$0xff] %v709
        %723 = vst [vmem:[%s352 + $0x28] sm:$0xff] %v711
        %724 = vst [vmem:[%s352 + $0x30] sm:$0xff] %v714
        %725 = vst [vmem:[%s352 + $0x38] sm:$0xff] %v716
        %s726 = sand.u32 %s228, 1
        %s727 = scalar_lea.sflag [#allocation4], %s726
        %s728 = sand.u32 %s228, 1
        %s729 = smul.addr %s728, 64
        %s730 = scalar_lea.vmem [#allocation5], %s729
        // Predicated region
        $region61: #{tpu_custom_call.1} parent=55 // pred_check
          %p731 = pneg %p238
        $region62: #{tpu_custom_call.1} parent=55 // pred_check_branch
          %733 = sbr.rel (%p731) target = $region64
        $region63: #{tpu_custom_call.1} parent=55 // pred_region
          %s734 = smul.u32 8, %s26
          %736 = vsyncadd %s727, 0
          %s737 = smul.addr %s734, 8
          %s738 = scalar_lea.hbm %s9, %s737
          %s739 = sshll.u32 %s730, 4
          %s740 = int_to_ptr.vmem [resolvable:$true] %s739
          %s741 = sshll.u32 %s738, 4
          %s742 = int_to_ptr.hbm [resolvable:$true] %s741
          %747 = dma.vmem_to_hbm [thread:$0]  %s740, 1024, %s742, %s727, 128, 128, 8
        $region64: #{tpu_custom_call.1} parent=55 // pred_fallthru
          _
      $region56: #{tpu_custom_call.1} parent=5 // pred_fallthru
        _
      %p748 = scmp.le.s32.totalorder 2, %s21
      // Predicated region
      $region65: #{tpu_custom_call.1} parent=5 // pred_check
        %p749 = pneg %p748
      $region66: #{tpu_custom_call.1} parent=5 // pred_check_branch
        %751 = sbr.rel (%p749) target = $region68
      $region67: #{tpu_custom_call.1} parent=5 // pred_region
        %s752 = ssub.s32 %s21, 2
        // Predicated region
        $region69: #{tpu_custom_call.1} parent=67 // pred_check
          %p753 = pneg %p244
        $region70: #{tpu_custom_call.1} parent=67 // pred_check_branch
          %755 = sbr.rel (%p753) target = $region72
        $region71: #{tpu_custom_call.1} parent=67 // pred_region
          %s756 = sand.u32 %s229, 1
          %s757 = scalar_lea.sflag [#allocation4], %s756
          %s758 = sand.u32 %s229, 1
          %s759 = smul.addr %s758, 64
          %s760 = scalar_lea.vmem [#allocation5], %s759
          %762 = dma.done %s757, 1024
        $region72: #{tpu_custom_call.1} parent=67 // pred_fallthru
          _
      $region68: #{tpu_custom_call.1} parent=5 // pred_fallthru
        _
    $region6: #{tpu_custom_call.1} parent=1 // loop_footer
      %s25 = sadd.s32 1, %s21
    $region7: #{tpu_custom_call.1} parent=1 // loop_footer_branch
      %20 = sbr.rel target = $region3
    $region8: #{tpu_custom_call.1} parent=1 // loop_exit
      _
    %763 = vsyncpa [#allocation3], 1
    %s764 = scalar_lea.sflag [#allocation3], 1
    %765 = vsyncpa %s764, 1
    %766 = vsyncpa [#allocation4], 1
    %s767 = scalar_lea.sflag [#allocation4], 1
    %768 = vsyncpa %s767, 1

</llo_original>
